<compile_context>
chip_gen: v5e
topology: v5e:2x2
jax: 0.10.0
libtpu: 0.0.40
codegen_flags: <defaults>
</compile_context>

<pallas_src>
import functools
import math

import jax
import jax.numpy as jnp
from jax.experimental import pallas as pl


def _graph_generator_kernel(xa_ref, xat_ref, wq_ref, wkt_ref, rep_ref,
                            kmask_ref, wprob_ref, bias_ref, out_ref,
                            *, batch, n_nodes, heads, n_prob, lo, hi, out_width):
    """Fused Graph_Generator forward for the whole (small) batch.

    xa_ref    (B*N, F)            augmented node features [seq_x | marks | 1]
    xat_ref   (F, B*N)            same, pre-transposed (for the K projection)
    wq_ref    (F, 2*H*hid)        folded Q projection  [simi | dist], 1/sqrt(hid) folded
    wkt_ref   (2*H*hid, F)        folded K projection, pre-transposed, dist half negated
    rep_ref   (N, 2*H*N)          column replicator  rep[j, c] = (c % N == j)
    kmask_ref (2*H*hid, 2*H*N)    head/half block-diagonal 0/1 mask
    wprob_ref (2*H*N, 2*P*N)      block-diag 1x1-conv weights with activation slopes folded
    bias_ref  (1, 2*P*N)          1x1-conv biases with slopes + 0.5 offsets folded
    out_ref   (B*N, out_width)    packed [graphs | probs | zero pad] slab (128-lane dense)
    """
    N = n_nodes
    GN = 2 * heads * N
    PN = 2 * n_prob * N
    pad = out_width - GN - PN
    span = hi - lo

    # Single augmented projection per layout (embedding / marks / bias / scale folded).
    q_all = jnp.dot(xa_ref[...], wq_ref[...],
                    preferred_element_type=jnp.float32)          # (B*N, 2*H*hid)
    kT_all = jnp.dot(wkt_ref[...], xat_ref[...],
                     preferred_element_type=jnp.float32)         # (2*H*hid, B*N)

    rep = rep_ref[...]
    kmask = kmask_ref[...]
    wprob = wprob_ref[...]
    bias = bias_ref[...]
    zeros_pad = jnp.zeros((N, pad), jnp.float32) if pad else None

    for b in range(batch):                                       # tiny static B -> unrolled
        q_b = q_all[b * N:(b + 1) * N, :]                        # (N, 2*H*hid)
        kT_b = kT_all[:, b * N:(b + 1) * N]                      # (2*H*hid, N)
        # Head-block-diagonal K expansion (dist half already negated at init).
        kexp = jnp.dot(kT_b, rep, preferred_element_type=jnp.float32) * kmask
        # One fused score matmul + one sigmoid -> [simi_graph | dist_graph].
        g = jax.nn.sigmoid(jnp.dot(q_b, kexp, preferred_element_type=jnp.float32))
        # Both 1x1 convs + activation slopes in one matmul; epilogue is one clip.
        pre = jnp.dot(g, wprob, preferred_element_type=jnp.float32) + bias
        prob = lo + span * jnp.clip(pre, 0.0, 1.0)
        parts = [g, prob] + ([zeros_pad] if pad else [])
        out_ref[b * N:(b + 1) * N, :] = jnp.concatenate(parts, axis=1).astype(out_ref.dtype)


class GraphGeneratorPallas:
    """JAX/Pallas implementation of DGCDN Graph_Generator (eval mode)."""

    def __init__(self, configs, key):
        self.cfg = configs
        C = configs["n_channels"]; L = configs["seq_len"]; H = configs["n_feat"]
        hid = configs["attn_hid_dim"]; P = configs["n_prob"]; M = configs["n_marks"]
        N = configs["n_nodes"]
        D = C * L
        HH = H * hid
        ks = jax.random.split(key, 8)
        s = 0.1

        # --- raw parameters (deterministic init) ------------------------------
        # TODO(synk): exact Graph_seq_Embedding definition unavailable; modeled as
        # a per-node value + time-mark linear embedding into n_channels channels.
        emb_wv = s * jax.random.normal(ks[0], (C,), jnp.float32)
        emb_wm = s * jax.random.normal(ks[1], (C, M), jnp.float32)
        emb_b = s * jax.random.normal(ks[2], (C,), jnp.float32)
        simi_wq = s * jax.random.normal(ks[3], (D, HH), jnp.float32)
        simi_wk = s * jax.random.normal(ks[4], (D, HH), jnp.float32)
        dist_wq = s * jax.random.normal(ks[5], (D, HH), jnp.float32)
        dist_wk = s * jax.random.normal(ks[6], (D, HH), jnp.float32)
        k7a, k7b, k7c, k7d = jax.random.split(ks[7], 4)
        posi_fc_w = s * jax.random.normal(k7a, (P, H), jnp.float32)
        posi_fc_b = s * jax.random.normal(k7b, (P,), jnp.float32)
        nega_fc_w = s * jax.random.normal(k7c, (P, H), jnp.float32)
        nega_fc_b = s * jax.random.normal(k7d, (P,), jnp.float32)

        # --- derived (folded) operators, computed once at init ----------------
        scale = 1.0 / math.sqrt(hid)
        # 1/sqrt(hid) folded into Q; dist-K negated so sigmoid(-s) == 1 - sigmoid(s).
        wq_all = jnp.concatenate([simi_wq, dist_wq], axis=1) * scale        # (D, 2*HH)
        wk_all = jnp.concatenate([simi_wk, -dist_wk], axis=1)               # (D, 2*HH)

        def fold_embedding(w):
            # Exact algebraic fold of x[c,n,l] = wv[c]*seq_x[l,n] + (Wm@marks)[c,l] + b[c]
            # into an augmented projection acting on [seq_x[:, n] | marks_flat | 1].
            w3 = w.reshape(C, L, w.shape[1])
            wv = jnp.einsum("c,clk->lk", emb_wv, w3)                        # (L, K)
            wm = jnp.einsum("cm,clk->lmk", emb_wm, w3).reshape(L * M, -1)   # (L*M, K)
            b0 = jnp.einsum("c,clk->k", emb_b, w3)[None, :]                 # (1, K)
            return jnp.concatenate([wv, wm, b0], axis=0)                    # (F, K)

        self.wq_aug = fold_embedding(wq_all)                                # (F, 2*HH)
        self.wk_augT = fold_embedding(wk_all).T                             # (2*HH, F)

        # Column replicator + head/half block-diagonal mask (compile-time constants,
        # hoisted out of the kernel and passed as grid-invariant VMEM inputs).
        HN = H * N
        j = jnp.arange(N)[:, None]
        c = jnp.arange(2 * HN)[None, :]
        self.rep = (c % N == j).astype(jnp.float32)                         # (N, 2*HN)
        r = jnp.arange(2 * HH)[:, None]
        half_r, head_r = r // HH, (r % HH) // hid
        half_c, head_c = c // HN, (c % HN) // N
        self.kmask = ((half_r == half_c) & (head_r == head_c)).astype(jnp.float32)

        # Both 1x1 convs (linear_as_conv2d) expanded into one block-diagonal slab
        # operator with the hard-tanh (x/2+1/2) / hard-sigmoid (x/6+1/2) slopes and
        # offsets folded in, so the kernel epilogue is lo + (hi-lo)*clip(pre, 0, 1).
        # TODO(synk): exact scale_hard_tanh / scale_hard_sigmoid definitions
        # unavailable; modeled as hardtanh / PyTorch hardsigmoid mapped to [lo, hi].
        eye = jnp.eye(N, dtype=jnp.float32)
        wp = jnp.einsum("ph,jk->hjpk", posi_fc_w * 0.5, eye).reshape(HN, P * N)
        wn = jnp.einsum("ph,jk->hjpk", nega_fc_w / 6.0, eye).reshape(HN, P * N)
        z = jnp.zeros((HN, P * N), jnp.float32)
        self.w_prob = jnp.block([[wp, z], [z, wn]])                          # (2*HN, 2*PN)
        self.bias_row = jnp.concatenate(
            [jnp.repeat(posi_fc_b * 0.5 + 0.5, N),
             jnp.repeat(nega_fc_b / 6.0 + 0.5, N)])[None, :]                 # (1, 2*PN)

        self._fwd = jax.jit(self._forward)

    def _forward(self, seq_x, seq_x_marks):
        cfg = self.cfg
        H, P, N = cfg["n_feat"], cfg["n_prob"], cfg["n_nodes"]
        L, M = cfg["seq_len"], cfg["n_marks"]
        lo, hi = cfg["gamma"]
        B = seq_x.shape[0]
        GN, PN = 2 * H * N, 2 * P * N
        out_w = pl.cdiv(GN + PN, 128) * 128          # 128-lane-dense packed output

        # Wrapper-side layout plumbing: augmented per-node feature rows
        #   X_aug[b*N+n, :] = [seq_x[b, :, n], marks_flat[b], 1]
        x_nodes = seq_x.transpose(0, 2, 1).reshape(B * N, L).astype(jnp.float32)
        marks = jnp.broadcast_to(seq_x_marks.reshape(B, 1, L * M),
                                 (B, N, L * M)).reshape(B * N, L * M).astype(jnp.float32)
        ones = jnp.ones((B * N, 1), jnp.float32)
        x_aug = jnp.concatenate([x_nodes, marks, ones], axis=1)             # (B*N, F)
        x_augT = x_aug.T                                                    # (F, B*N)

        kernel = functools.partial(
            _graph_generator_kernel, batch=B, n_nodes=N, heads=H, n_prob=P,
            lo=float(lo), hi=float(hi), out_width=out_w)

        # ONE grid-free pallas_call: whole batch in a single step (no per-grid-step
        # overhead at these tiny shapes); everything lives in VMEM.
        # TODO(synk): for large N / B, grid over N-blocks and a parallel batch axis.
        out = pl.pallas_call(
            kernel,
            out_shape=jax.ShapeDtypeStruct((B * N, out_w), jnp.float32),
        )(x_aug, x_augT, self.wq_aug, self.wk_augT, self.rep, self.kmask,
          self.w_prob, self.bias_row)

        # Layout plumbing back to [B, C, N, N] (pure reshape/transpose/slice).
        out = out.reshape(B, N, out_w)
        g = out[:, :, :GN].reshape(B, N, 2, H, N).transpose(0, 2, 3, 1, 4)
        simi_graph, dist_graph = g[:, 0], g[:, 1]
        p = out[:, :, GN:GN + PN].reshape(B, N, 2, P, N).transpose(0, 2, 3, 1, 4)
        posi_prob, nega_prob = p[:, 0], p[:, 1]

        real_graph = posi_prob                     # prob_filter=False
        cl_loss = jnp.float32(0.0)                 # feat/prob CL losses disabled
        return real_graph, cl_loss, (simi_graph, dist_graph, nega_prob)

    def __call__(self, seq_x, seq_x_marks):
        return self._fwd(seq_x, seq_x_marks)


if __name__ == "__main__":
    configs = dict(
        n_feat=4, seq_len=8, n_channels=4, attn_hid_dim=32, n_prob=2,
        n_nodes=8, n_marks=3, dropout=0.0, simi_type="attn", dist_type="attn",
        local_obs=True, global_obs=False, feat_cl_loss=False, prob_cl_loss=False,
        memory_type="LPM", LPM_learnable=False, gamma=(0.05, 0.95),
        feat_filter=False, prob_filter=False, graph_noise=0.0,
        sparity_rate=0.1, batch_size=2,
    )
    key = jax.random.PRNGKey(0)
    k_in, k_mark, k_param = jax.random.split(key, 3)
    B, L, N, M = 2, configs["seq_len"], configs["n_nodes"], configs["n_marks"]
    seq_x = jax.random.normal(k_in, (B, L, N), jnp.float32)
    seq_x_marks = jax.random.normal(k_mark, (B, L, M), jnp.float32)

    model = GraphGeneratorPallas(configs, k_param)
    real_graph, cl_loss, (simi_graph, dist_graph, nega_prob) = model(seq_x, seq_x_marks)
    jax.block_until_ready((real_graph, cl_loss))
    assert real_graph.shape == (B, configs["n_prob"], N, N)
    assert simi_graph.shape == (B, configs["n_feat"], N, N)
    assert dist_graph.shape == (B, configs["n_feat"], N, N)
    assert nega_prob.shape == (B, configs["n_prob"], N, N)
    assert bool(jnp.all(jnp.isfinite(real_graph)))
    assert bool(jnp.all((real_graph >= configs["gamma"][0]) & (real_graph <= configs["gamma"][1])))
    print("KERNEL_OK")
</pallas_src>

<mosaic_0001>
module attributes {stable_mosaic.version = 11 : i64} {
  func.func @_graph_generator_kernel(%arg0: memref<16x33xf32, #tpu.memory_space<vmem>>, %arg1: memref<33x16xf32, #tpu.memory_space<vmem>>, %arg2: memref<33x256xf32, #tpu.memory_space<vmem>>, %arg3: memref<256x33xf32, #tpu.memory_space<vmem>>, %arg4: memref<8x64xf32, #tpu.memory_space<vmem>>, %arg5: memref<256x64xf32, #tpu.memory_space<vmem>>, %arg6: memref<64x32xf32, #tpu.memory_space<vmem>>, %arg7: memref<1x32xf32, #tpu.memory_space<vmem>>, %arg8: memref<16x128xf32, #tpu.memory_space<vmem>>) attributes {dimension_semantics = [], scalar_prefetch = 0 : i64, scratch_operands = 0 : i64, tpu.core_type = #tpu.core_type<tc>} {
    %c0 = arith.constant 0 : index
    %c0_0 = arith.constant 0 : index
    %0 = vector.load %arg0[%c0, %c0_0] : memref<16x33xf32, #tpu.memory_space<vmem>>, vector<16x33xf32>
    %c0_1 = arith.constant 0 : index
    %c0_2 = arith.constant 0 : index
    %1 = vector.load %arg2[%c0_1, %c0_2] : memref<33x256xf32, #tpu.memory_space<vmem>>, vector<33x256xf32>
    %cst = arith.constant dense<0.000000e+00> : vector<16x256xf32>
    %2 = tpu.matmul %0, %1, %cst {dimension_numbers = #tpu.dot_dimension_numbers<[1], [0], [0], [1], [0, 0, 1, 1], [], []>} : vector<16x33xf32>, vector<33x256xf32>, vector<16x256xf32> -> vector<16x256xf32>
    %c0_3 = arith.constant 0 : index
    %c0_4 = arith.constant 0 : index
    %3 = vector.load %arg3[%c0_3, %c0_4] : memref<256x33xf32, #tpu.memory_space<vmem>>, vector<256x33xf32>
    %c0_5 = arith.constant 0 : index
    %c0_6 = arith.constant 0 : index
    %4 = vector.load %arg1[%c0_5, %c0_6] : memref<33x16xf32, #tpu.memory_space<vmem>>, vector<33x16xf32>
    %cst_7 = arith.constant dense<0.000000e+00> : vector<256x16xf32>
    %5 = tpu.matmul %3, %4, %cst_7 {dimension_numbers = #tpu.dot_dimension_numbers<[1], [0], [0], [1], [0, 0, 1, 1], [], []>} : vector<256x33xf32>, vector<33x16xf32>, vector<256x16xf32> -> vector<256x16xf32>
    %c0_8 = arith.constant 0 : index
    %c0_9 = arith.constant 0 : index
    %6 = vector.load %arg4[%c0_8, %c0_9] : memref<8x64xf32, #tpu.memory_space<vmem>>, vector<8x64xf32>
    %c0_10 = arith.constant 0 : index
    %c0_11 = arith.constant 0 : index
    %7 = vector.load %arg5[%c0_10, %c0_11] : memref<256x64xf32, #tpu.memory_space<vmem>>, vector<256x64xf32>
    %c0_12 = arith.constant 0 : index
    %c0_13 = arith.constant 0 : index
    %8 = vector.load %arg6[%c0_12, %c0_13] : memref<64x32xf32, #tpu.memory_space<vmem>>, vector<64x32xf32>
    %c0_14 = arith.constant 0 : index
    %c0_15 = arith.constant 0 : index
    %9 = vector.load %arg7[%c0_14, %c0_15] : memref<1x32xf32, #tpu.memory_space<vmem>>, vector<1x32xf32>
    %cst_16 = arith.constant 0.000000e+00 : f32
    %10 = vector.broadcast %cst_16 : f32 to vector<8x32xf32>
    %11 = vector.extract_strided_slice %2 {offsets = [0, 0], sizes = [8, 256], strides = [1, 1]} : vector<16x256xf32> to vector<8x256xf32>
    %12 = vector.extract_strided_slice %5 {offsets = [0, 0], sizes = [256, 8], strides = [1, 1]} : vector<256x16xf32> to vector<256x8xf32>
    %cst_17 = arith.constant dense<0.000000e+00> : vector<256x64xf32>
    %13 = tpu.matmul %12, %6, %cst_17 {dimension_numbers = #tpu.dot_dimension_numbers<[1], [0], [0], [1], [0, 0, 1, 1], [], []>} : vector<256x8xf32>, vector<8x64xf32>, vector<256x64xf32> -> vector<256x64xf32>
    %14 = arith.mulf %13, %7 : vector<256x64xf32>
    %cst_18 = arith.constant dense<0.000000e+00> : vector<8x64xf32>
    %15 = tpu.matmul %11, %14, %cst_18 {dimension_numbers = #tpu.dot_dimension_numbers<[1], [0], [0], [1], [0, 0, 1, 1], [], []>} : vector<8x256xf32>, vector<256x64xf32>, vector<8x64xf32> -> vector<8x64xf32>
    %16 = arith.negf %15 : vector<8x64xf32>
    %17 = math.exp %16 : vector<8x64xf32>
    %cst_19 = arith.constant 1.000000e+00 : f32
    %18 = vector.broadcast %cst_19 : f32 to vector<8x64xf32>
    %19 = arith.addf %18, %17 : vector<8x64xf32>
    %20 = arith.divf %18, %19 : vector<8x64xf32>
    %cst_20 = arith.constant dense<0.000000e+00> : vector<8x32xf32>
    %21 = tpu.matmul %20, %8, %cst_20 {dimension_numbers = #tpu.dot_dimension_numbers<[1], [0], [0], [1], [0, 0, 1, 1], [], []>} : vector<8x64xf32>, vector<64x32xf32>, vector<8x32xf32> -> vector<8x32xf32>
    %22 = vector.broadcast %9 : vector<1x32xf32> to vector<8x32xf32>
    %23 = arith.addf %21, %22 : vector<8x32xf32>
    %cst_21 = arith.constant 0.000000e+00 : f32
    %cst_22 = arith.constant 1.000000e+00 : f32
    %24 = vector.broadcast %cst_21 : f32 to vector<8x32xf32>
    %25 = arith.maximumf %24, %23 : vector<8x32xf32>
    %26 = vector.broadcast %cst_22 : f32 to vector<8x32xf32>
    %27 = arith.minimumf %26, %25 : vector<8x32xf32>
    %cst_23 = arith.constant 0.899999976 : f32
    %28 = vector.broadcast %cst_23 : f32 to vector<8x32xf32>
    %29 = arith.mulf %28, %27 : vector<8x32xf32>
    %cst_24 = arith.constant 5.000000e-02 : f32
    %30 = vector.broadcast %cst_24 : f32 to vector<8x32xf32>
    %31 = arith.addf %30, %29 : vector<8x32xf32>
    %32 = tpu.concatenate %20, %31, %10 in 1 : vector<8x64xf32>, vector<8x32xf32>, vector<8x32xf32> -> vector<8x128xf32>
    %c0_25 = arith.constant 0 : index
    %c0_26 = arith.constant 0 : index
    %33 = vector.load %arg8[%c0_25, %c0_26] : memref<16x128xf32, #tpu.memory_space<vmem>>, vector<8x128xf32>
    tpu.vector_store %arg8[%c0_25, %c0_26], %32 {strides = array<i32>} : memref<16x128xf32, #tpu.memory_space<vmem>>, vector<8x128xf32>,
    %34 = vector.extract_strided_slice %2 {offsets = [8, 0], sizes = [8, 256], strides = [1, 1]} : vector<16x256xf32> to vector<8x256xf32>
    %35 = vector.extract_strided_slice %5 {offsets = [0, 8], sizes = [256, 8], strides = [1, 1]} : vector<256x16xf32> to vector<256x8xf32>
    %cst_27 = arith.constant dense<0.000000e+00> : vector<256x64xf32>
    %36 = tpu.matmul %35, %6, %cst_27 {dimension_numbers = #tpu.dot_dimension_numbers<[1], [0], [0], [1], [0, 0, 1, 1], [], []>} : vector<256x8xf32>, vector<8x64xf32>, vector<256x64xf32> -> vector<256x64xf32>
    %37 = arith.mulf %36, %7 : vector<256x64xf32>
    %cst_28 = arith.constant dense<0.000000e+00> : vector<8x64xf32>
    %38 = tpu.matmul %34, %37, %cst_28 {dimension_numbers = #tpu.dot_dimension_numbers<[1], [0], [0], [1], [0, 0, 1, 1], [], []>} : vector<8x256xf32>, vector<256x64xf32>, vector<8x64xf32> -> vector<8x64xf32>
    %39 = arith.negf %38 : vector<8x64xf32>
    %40 = math.exp %39 : vector<8x64xf32>
    %cst_29 = arith.constant 1.000000e+00 : f32
    %41 = vector.broadcast %cst_29 : f32 to vector<8x64xf32>
    %42 = arith.addf %41, %40 : vector<8x64xf32>
    %43 = arith.divf %41, %42 : vector<8x64xf32>
    %cst_30 = arith.constant dense<0.000000e+00> : vector<8x32xf32>
    %44 = tpu.matmul %43, %8, %cst_30 {dimension_numbers = #tpu.dot_dimension_numbers<[1], [0], [0], [1], [0, 0, 1, 1], [], []>} : vector<8x64xf32>, vector<64x32xf32>, vector<8x32xf32> -> vector<8x32xf32>
    %45 = vector.broadcast %9 : vector<1x32xf32> to vector<8x32xf32>
    %46 = arith.addf %44, %45 : vector<8x32xf32>
    %cst_31 = arith.constant 0.000000e+00 : f32
    %cst_32 = arith.constant 1.000000e+00 : f32
    %47 = vector.broadcast %cst_31 : f32 to vector<8x32xf32>
    %48 = arith.maximumf %47, %46 : vector<8x32xf32>
    %49 = vector.broadcast %cst_32 : f32 to vector<8x32xf32>
    %50 = arith.minimumf %49, %48 : vector<8x32xf32>
    %cst_33 = arith.constant 0.899999976 : f32
    %51 = vector.broadcast %cst_33 : f32 to vector<8x32xf32>
    %52 = arith.mulf %51, %50 : vector<8x32xf32>
    %cst_34 = arith.constant 5.000000e-02 : f32
    %53 = vector.broadcast %cst_34 : f32 to vector<8x32xf32>
    %54 = arith.addf %53, %52 : vector<8x32xf32>
    %55 = tpu.concatenate %43, %54, %10 in 1 : vector<8x64xf32>, vector<8x32xf32>, vector<8x32xf32> -> vector<8x128xf32>
    %c8 = arith.constant 8 : index
    %c0_35 = arith.constant 0 : index
    %56 = vector.load %arg8[%c8, %c0_35] : memref<16x128xf32, #tpu.memory_space<vmem>>, vector<8x128xf32>
    tpu.vector_store %arg8[%c8, %c0_35], %55 {strides = array<i32>} : memref<16x128xf32, #tpu.memory_space<vmem>>, vector<8x128xf32>,
    return
  }
}

</mosaic_0001>

<llo_original>
// kernel: _forward.1
$region0: #{_forward.1}
  #allocation0 [shape = 'u32[]', space=smem, size = 0x4, offset = 0x4, fixed_abs, tag = 'smem constant byte address 0x4 - core index']
  #allocation1 [shape = 'u32[72,128]{1,0:T(1,128)}', space=vmem, size = 0x9000, scoped, tag = 'internal scratch']
  %s0 = inlined_call_operand.vmem [shape: f32[16,33], index: 0, kind: input, shape index: {}]
  %s1 = inlined_call_operand.vmem [shape: f32[33,16], index: 1, kind: input, shape index: {}]
  %s2 = inlined_call_operand.vmem [shape: f32[33,256], index: 2, kind: input, shape index: {}]
  %s3 = inlined_call_operand.hbm [shape: f32[256,33], index: 3, kind: input, shape index: {}]
  %s4 = inlined_call_operand.vmem [shape: f32[8,64], index: 4, kind: input, shape index: {}]
  %s5 = inlined_call_operand.hbm [shape: f32[256,64], index: 5, kind: input, shape index: {}]
  %s6 = inlined_call_operand.vmem [shape: f32[64,32], index: 6, kind: input, shape index: {}]
  %s7 = inlined_call_operand.vmem [shape: f32[1,32], index: 7, kind: input, shape index: {}]
  %s8 = inlined_call_operand.vmem [shape: f32[16,128], index: 8, kind: output, shape index: {}]
  %s9 = sld [smem:[#allocation0]]
  $region50: #{_forward.1} parent=0
    _
  %s11 = ssub.s32 1, %s9
  %s12 = scalar_select 0, %s11, %s9
  $region1: #{_forward.1} parent=0
    #allocation2 [shape = 'u8[131072]{0}', space=vmem, size = 0x20000, scoped, tag = 'input window, operand 3, single buffered']
    #allocation3 [shape = 's32[1]{0}', space=sflag, size = 0x4, scoped, tag = 'scoped memory for _forward.1']
    #allocation4 [shape = 'u8[131072]{0}', space=vmem, size = 0x20000, scoped, tag = 'input window, operand 5, single buffered']
    #allocation5 [shape = 's32[1]{0}', space=sflag, size = 0x4, scoped, tag = 'scoped memory for _forward.1']
    %13 = vsyncpa [#allocation3], 0
    %14 = vsyncpa [#allocation5], 0
    // Predicated region
    $region2: #{_forward.1} parent=1 // pred_check
      _
    $region3: #{_forward.1} parent=1 // pred_check_branch
      %16 = sbr.rel (0) target = $region5
    $region4: #{_forward.1} parent=1 // pred_region
      _
    $region5: #{_forward.1} parent=1 // pred_fallthru
      _
    // Predicated region
    $region6: #{_forward.1} parent=1 // pred_check
      _
    $region7: #{_forward.1} parent=1 // pred_check_branch
      %18 = sbr.rel (0) target = $region9
    $region8: #{_forward.1} parent=1 // pred_region
      _
    $region9: #{_forward.1} parent=1 // pred_fallthru
      _
    // Predicated region
    $region10: #{_forward.1} parent=1 // pred_check
      _
    $region11: #{_forward.1} parent=1 // pred_check_branch
      %20 = sbr.rel (0) target = $region13
    $region12: #{_forward.1} parent=1 // pred_region
      _
    $region13: #{_forward.1} parent=1 // pred_fallthru
      _
    // Predicated region
    $region14: #{_forward.1} parent=1 // pred_check
      _
    $region15: #{_forward.1} parent=1 // pred_check_branch
      %22 = sbr.rel (0) target = $region17
    $region16: #{_forward.1} parent=1 // pred_region
      %24 = vsyncadd [#allocation3], 0
      %s25 = sshll.u32 %s3, 4
      %s26 = int_to_ptr.hbm [resolvable:$true] %s25
      %s27 = sshll.u32 [#allocation2], 4
      %s28 = int_to_ptr.vmem [resolvable:$true] %s27
      %33 = dma.hbm_to_vmem [thread:$0]  %s26, 4096, %s28, [#allocation3], 128, 128, 8
    $region17: #{_forward.1} parent=1 // pred_fallthru
      _
    // Predicated region
    $region18: #{_forward.1} parent=1 // pred_check
      _
    $region19: #{_forward.1} parent=1 // pred_check_branch
      %35 = sbr.rel (0) target = $region21
    $region20: #{_forward.1} parent=1 // pred_region
      _
    $region21: #{_forward.1} parent=1 // pred_fallthru
      _
    // Predicated region
    $region22: #{_forward.1} parent=1 // pred_check
      _
    $region23: #{_forward.1} parent=1 // pred_check_branch
      %37 = sbr.rel (0) target = $region25
    $region24: #{_forward.1} parent=1 // pred_region
      %39 = vsyncadd [#allocation5], 0
      %s40 = sshll.u32 %s5, 4
      %s41 = int_to_ptr.hbm [resolvable:$true] %s40
      %s42 = sshll.u32 [#allocation4], 4
      %s43 = int_to_ptr.vmem [resolvable:$true] %s42
      %48 = dma.hbm_to_vmem [thread:$0]  %s41, 4096, %s43, [#allocation5], 128, 128, 8
    $region25: #{_forward.1} parent=1 // pred_fallthru
      _
    // Predicated region
    $region26: #{_forward.1} parent=1 // pred_check
      _
    $region27: #{_forward.1} parent=1 // pred_check_branch
      %50 = sbr.rel (0) target = $region29
    $region28: #{_forward.1} parent=1 // pred_region
      _
    $region29: #{_forward.1} parent=1 // pred_fallthru
      _
    // Predicated region
    $region30: #{_forward.1} parent=1 // pred_check
      _
    $region31: #{_forward.1} parent=1 // pred_check_branch
      %52 = sbr.rel (0) target = $region33
    $region32: #{_forward.1} parent=1 // pred_region
      _
    $region33: #{_forward.1} parent=1 // pred_fallthru
      _
    // Predicated region
    $region34: #{_forward.1} parent=1 // pred_check
      _
    $region35: #{_forward.1} parent=1 // pred_check_branch
      %54 = sbr.rel (0) target = $region37
    $region36: #{_forward.1} parent=1 // pred_region
      %56 = dma.done [#allocation3], 4096
    $region37: #{_forward.1} parent=1 // pred_fallthru
      _
    // Predicated region
    $region38: #{_forward.1} parent=1 // pred_check
      _
    $region39: #{_forward.1} parent=1 // pred_check_branch
      %58 = sbr.rel (0) target = $region41
    $region40: #{_forward.1} parent=1 // pred_region
      %60 = dma.done [#allocation5], 4096
    $region41: #{_forward.1} parent=1 // pred_fallthru
      _
    %v61 = vld [vmem:[%s0] sm:$0xff]
    %v62 = vld [vmem:[%s0 + $0x8] sm:$0xff]
    %v63 = vld [vmem:[%s2] sm:$0xff]
    %v64 = vld [vmem:[%s2 + $0x8] sm:$0xff]
    %v65 = vld [vmem:[%s2 + $0x10] sm:$0xff]
    %v66 = vld [vmem:[%s2 + $0x18] sm:$0xff]
    %v67 = vld [vmem:[%s2 + $0x20] sm:$0xff]
    %v68 = vld [vmem:[%s2 + $0x28] sm:$0xff]
    %v69 = vld [vmem:[%s2 + $0x30] sm:$0xff]
    %v70 = vld [vmem:[%s2 + $0x38] sm:$0xff]
    %v71 = vld [vmem:[%s2 + $0x40] sm:$0x1]
    %v72 = vld [vmem:[%s2 + $0x48] sm:$0x1]
    %vm73 = vcmask 269312
    %v75 = vsel %vm73, %v61, 0
    %v78 = vsel %vm73, %v62, 0
    %vm80 = vcmask 1040384
    %v82 = vsel %vm80, %v71, 0
    %v85 = vsel %vm80, %v72, 0
    %87 = vmatpush.msra.mxu0 0.0
    %88 = vmatpush.msra.mxu0 0.0
    %89 = vmatpush.msra.mxu0 0.0
    %90 = vmatpush.msra.mxu0 0.0
    %91 = vmatpush.msra.mxu0 0.0
    %92 = vmatpush.msra.mxu0 0.0
    %93 = vmatpush.msra.mxu0 0.0
    %94 = vmatpush.msra.mxu0 0.0
    %95 = vmatpush.msra.mxu0 0.0
    %96 = vmatpush.msra.mxu0 0.0
    %97 = vmatpush.msra.mxu0 0.0
    %98 = vmatpush.msra.mxu0 %v82
    %99 = vmatpush.msra.mxu0 %v69
    %100 = vmatpush.msra.mxu0 %v67
    %101 = vmatpush.msra.mxu0 %v65
    %102 = vmatpush.msra.mxu0 %v63
    %103 = vmatmul.f32.gmra.mxu0 %v75
    %v104 = vpop.f32.mrf.mxu0
    %v105 = vadd.f32 0.0, %v104
    %106 = vmatmul.f32.gmra.mxu0 %v78
    %v107 = vpop.f32.mrf.mxu0
    %v108 = vadd.f32 0.0, %v107
    %109 = vdwg.mxu0
    %110 = vmatpush.msra.mxu0 0.0
    %111 = vmatpush.msra.mxu0 0.0
    %112 = vmatpush.msra.mxu0 0.0
    %113 = vmatpush.msra.mxu0 0.0
    %114 = vmatpush.msra.mxu0 0.0
    %115 = vmatpush.msra.mxu0 0.0
    %116 = vmatpush.msra.mxu0 0.0
    %117 = vmatpush.msra.mxu0 0.0
    %118 = vmatpush.msra.mxu0 0.0
    %119 = vmatpush.msra.mxu0 0.0
    %120 = vmatpush.msra.mxu0 0.0
    %121 = vmatpush.msra.mxu0 %v85
    %122 = vmatpush.msra.mxu0 %v70
    %123 = vmatpush.msra.mxu0 %v68
    %124 = vmatpush.msra.mxu0 %v66
    %125 = vmatpush.msra.mxu0 %v64
    %126 = vmatmul.f32.gmra.mxu0 %v75
    %v127 = vpop.f32.mrf.mxu0
    %v128 = vadd.f32 0.0, %v127
    %129 = vmatmul.f32.gmra.mxu0 %v78
    %v130 = vpop.f32.mrf.mxu0
    %v131 = vadd.f32 0.0, %v130
    %132 = vdwg.mxu0
    %v133 = vld [vmem:[#allocation2] sm:$0xff]
    %v134 = vld [vmem:[#allocation2 + $0x8] sm:$0xff]
    %v135 = vld [vmem:[#allocation2 + $0x10] sm:$0xff]
    %v136 = vld [vmem:[#allocation2 + $0x18] sm:$0xff]
    %v137 = vld [vmem:[#allocation2 + $0x20] sm:$0xff]
    %v138 = vld [vmem:[#allocation2 + $0x28] sm:$0xff]
    %v139 = vld [vmem:[#allocation2 + $0x30] sm:$0xff]
    %v140 = vld [vmem:[#allocation2 + $0x38] sm:$0xff]
    %v141 = vld [vmem:[#allocation2 + $0x40] sm:$0xff]
    %v142 = vld [vmem:[#allocation2 + $0x48] sm:$0xff]
    %v143 = vld [vmem:[#allocation2 + $0x50] sm:$0xff]
    %v144 = vld [vmem:[#allocation2 + $0x58] sm:$0xff]
    %v145 = vld [vmem:[#allocation2 + $0x60] sm:$0xff]
    %v146 = vld [vmem:[#allocation2 + $0x68] sm:$0xff]
    %v147 = vld [vmem:[#allocation2 + $0x70] sm:$0xff]
    %v148 = vld [vmem:[#allocation2 + $0x78] sm:$0xff]
    %v149 = vld [vmem:[#allocation2 + $0x80] sm:$0xff]
    %v150 = vld [vmem:[#allocation2 + $0x88] sm:$0xff]
    %v151 = vld [vmem:[#allocation2 + $0x90] sm:$0xff]
    %v152 = vld [vmem:[#allocation2 + $0x98] sm:$0xff]
    %v153 = vld [vmem:[#allocation2 + $0xa0] sm:$0xff]
    %v154 = vld [vmem:[#allocation2 + $0xa8] sm:$0xff]
    %v155 = vld [vmem:[#allocation2 + $0xb0] sm:$0xff]
    %v156 = vld [vmem:[#allocation2 + $0xb8] sm:$0xff]
    %v157 = vld [vmem:[#allocation2 + $0xc0] sm:$0xff]
    %v158 = vld [vmem:[#allocation2 + $0xc8] sm:$0xff]
    %v159 = vld [vmem:[#allocation2 + $0xd0] sm:$0xff]
    %v160 = vld [vmem:[#allocation2 + $0xd8] sm:$0xff]
    %v161 = vld [vmem:[#allocation2 + $0xe0] sm:$0xff]
    %v162 = vld [vmem:[#allocation2 + $0xe8] sm:$0xff]
    %v163 = vld [vmem:[#allocation2 + $0xf0] sm:$0xff]
    %v164 = vld [vmem:[#allocation2 + $0xf8] sm:$0xff]
    %v165 = vld [vmem:[%s1] sm:$0xff]
    %v166 = vld [vmem:[%s1 + $0x8] sm:$0xff]
    %v167 = vld [vmem:[%s1 + $0x10] sm:$0xff]
    %v168 = vld [vmem:[%s1 + $0x18] sm:$0xff]
    %v169 = vld [vmem:[%s1 + $0x20] sm:$0x1]
    %v171 = vsel %vm73, %v133, 0
    %v174 = vsel %vm73, %v134, 0
    %v177 = vsel %vm73, %v135, 0
    %v180 = vsel %vm73, %v136, 0
    %v183 = vsel %vm73, %v137, 0
    %v186 = vsel %vm73, %v138, 0
    %v189 = vsel %vm73, %v139, 0
    %v192 = vsel %vm73, %v140, 0
    %v195 = vsel %vm73, %v141, 0
    %v198 = vsel %vm73, %v142, 0
    %v201 = vsel %vm73, %v143, 0
    %v204 = vsel %vm73, %v144, 0
    %v207 = vsel %vm73, %v145, 0
    %v210 = vsel %vm73, %v146, 0
    %v213 = vsel %vm73, %v147, 0
    %v216 = vsel %vm73, %v148, 0
    %v219 = vsel %vm73, %v149, 0
    %v222 = vsel %vm73, %v150, 0
    %v225 = vsel %vm73, %v151, 0
    %v228 = vsel %vm73, %v152, 0
    %v231 = vsel %vm73, %v153, 0
    %v234 = vsel %vm73, %v154, 0
    %v237 = vsel %vm73, %v155, 0
    %v240 = vsel %vm73, %v156, 0
    %v243 = vsel %vm73, %v157, 0
    %v246 = vsel %vm73, %v158, 0
    %v249 = vsel %vm73, %v159, 0
    %v252 = vsel %vm73, %v160, 0
    %v255 = vsel %vm73, %v161, 0
    %v258 = vsel %vm73, %v162, 0
    %v261 = vsel %vm73, %v163, 0
    %v264 = vsel %vm73, %v164, 0
    %v267 = vsel %vm80, %v169, 0
    %269 = vmatpush.msra.mxu0 0.0
    %270 = vmatpush.msra.mxu0 0.0
    %271 = vmatpush.msra.mxu0 0.0
    %272 = vmatpush.msra.mxu0 0.0
    %273 = vmatpush.msra.mxu0 0.0
    %274 = vmatpush.msra.mxu0 0.0
    %275 = vmatpush.msra.mxu0 0.0
    %276 = vmatpush.msra.mxu0 0.0
    %277 = vmatpush.msra.mxu0 0.0
    %278 = vmatpush.msra.mxu0 0.0
    %279 = vmatpush.msra.mxu0 0.0
    %280 = vmatpush.msra.mxu0 %v267
    %281 = vmatpush.msra.mxu0 %v168
    %282 = vmatpush.msra.mxu0 %v167
    %283 = vmatpush.msra.mxu0 %v166
    %284 = vmatpush.msra.mxu0 %v165
    %285 = vmatmul.f32.gmra.mxu0 %v171
    %v286 = vpop.f32.mrf.mxu0
    %v287 = vadd.f32 0.0, %v286
    %288 = vmatmul.f32.gmra.mxu0 %v174
    %v289 = vpop.f32.mrf.mxu0
    %v290 = vadd.f32 0.0, %v289
    %291 = vmatmul.f32.gmra.mxu0 %v177
    %v292 = vpop.f32.mrf.mxu0
    %v293 = vadd.f32 0.0, %v292
    %294 = vmatmul.f32.gmra.mxu0 %v180
    %v295 = vpop.f32.mrf.mxu0
    %v296 = vadd.f32 0.0, %v295
    %297 = vmatmul.f32.gmra.mxu0 %v183
    %v298 = vpop.f32.mrf.mxu0
    %v299 = vadd.f32 0.0, %v298
    %300 = vmatmul.f32.gmra.mxu0 %v186
    %v301 = vpop.f32.mrf.mxu0
    %v302 = vadd.f32 0.0, %v301
    %303 = vmatmul.f32.gmra.mxu0 %v189
    %v304 = vpop.f32.mrf.mxu0
    %v305 = vadd.f32 0.0, %v304
    %306 = vmatmul.f32.gmra.mxu0 %v192
    %v307 = vpop.f32.mrf.mxu0
    %v308 = vadd.f32 0.0, %v307
    %309 = vmatmul.f32.gmra.mxu0 %v195
    %v310 = vpop.f32.mrf.mxu0
    %v311 = vadd.f32 0.0, %v310
    %312 = vmatmul.f32.gmra.mxu0 %v198
    %v313 = vpop.f32.mrf.mxu0
    %v314 = vadd.f32 0.0, %v313
    %315 = vmatmul.f32.gmra.mxu0 %v201
    %v316 = vpop.f32.mrf.mxu0
    %v317 = vadd.f32 0.0, %v316
    %318 = vmatmul.f32.gmra.mxu0 %v204
    %v319 = vpop.f32.mrf.mxu0
    %v320 = vadd.f32 0.0, %v319
    %321 = vmatmul.f32.gmra.mxu0 %v207
    %v322 = vpop.f32.mrf.mxu0
    %v323 = vadd.f32 0.0, %v322
    %324 = vmatmul.f32.gmra.mxu0 %v210
    %v325 = vpop.f32.mrf.mxu0
    %v326 = vadd.f32 0.0, %v325
    %327 = vmatmul.f32.gmra.mxu0 %v213
    %v328 = vpop.f32.mrf.mxu0
    %v329 = vadd.f32 0.0, %v328
    %330 = vmatmul.f32.gmra.mxu0 %v216
    %v331 = vpop.f32.mrf.mxu0
    %v332 = vadd.f32 0.0, %v331
    %333 = vmatmul.f32.gmra.mxu0 %v219
    %v334 = vpop.f32.mrf.mxu0
    %v335 = vadd.f32 0.0, %v334
    %336 = vmatmul.f32.gmra.mxu0 %v222
    %v337 = vpop.f32.mrf.mxu0
    %v338 = vadd.f32 0.0, %v337
    %339 = vmatmul.f32.gmra.mxu0 %v225
    %v340 = vpop.f32.mrf.mxu0
    %v341 = vadd.f32 0.0, %v340
    %342 = vmatmul.f32.gmra.mxu0 %v228
    %v343 = vpop.f32.mrf.mxu0
    %v344 = vadd.f32 0.0, %v343
    %345 = vmatmul.f32.gmra.mxu0 %v231
    %v346 = vpop.f32.mrf.mxu0
    %v347 = vadd.f32 0.0, %v346
    %348 = vmatmul.f32.gmra.mxu0 %v234
    %v349 = vpop.f32.mrf.mxu0
    %v350 = vadd.f32 0.0, %v349
    %351 = vmatmul.f32.gmra.mxu0 %v237
    %v352 = vpop.f32.mrf.mxu0
    %v353 = vadd.f32 0.0, %v352
    %354 = vmatmul.f32.gmra.mxu0 %v240
    %v355 = vpop.f32.mrf.mxu0
    %v356 = vadd.f32 0.0, %v355
    %357 = vmatmul.f32.gmra.mxu0 %v243
    %v358 = vpop.f32.mrf.mxu0
    %v359 = vadd.f32 0.0, %v358
    %360 = vmatmul.f32.gmra.mxu0 %v246
    %v361 = vpop.f32.mrf.mxu0
    %v362 = vadd.f32 0.0, %v361
    %363 = vmatmul.f32.gmra.mxu0 %v249
    %v364 = vpop.f32.mrf.mxu0
    %v365 = vadd.f32 0.0, %v364
    %366 = vmatmul.f32.gmra.mxu0 %v252
    %v367 = vpop.f32.mrf.mxu0
    %v368 = vadd.f32 0.0, %v367
    %369 = vmatmul.f32.gmra.mxu0 %v255
    %v370 = vpop.f32.mrf.mxu0
    %v371 = vadd.f32 0.0, %v370
    %372 = vmatmul.f32.gmra.mxu0 %v258
    %v373 = vpop.f32.mrf.mxu0
    %v374 = vadd.f32 0.0, %v373
    %375 = vmatmul.f32.gmra.mxu0 %v261
    %v376 = vpop.f32.mrf.mxu0
    %v377 = vadd.f32 0.0, %v376
    %378 = vmatmul.f32.gmra.mxu0 %v264
    %v379 = vpop.f32.mrf.mxu0
    %v380 = vadd.f32 0.0, %v379
    %381 = vdwg.mxu0
    %v382 = vld [vmem:[%s4] sm:$0xff]
    %v383 = vld [vmem:[#allocation4] sm:$0xff]
    %v384 = vld [vmem:[#allocation4 + $0x8] sm:$0xff]
    %v385 = vld [vmem:[#allocation4 + $0x10] sm:$0xff]
    %v386 = vld [vmem:[#allocation4 + $0x18] sm:$0xff]
    %v387 = vld [vmem:[#allocation4 + $0x20] sm:$0xff]
    %v388 = vld [vmem:[#allocation4 + $0x28] sm:$0xff]
    %v389 = vld [vmem:[#allocation4 + $0x30] sm:$0xff]
    %v390 = vld [vmem:[#allocation4 + $0x38] sm:$0xff]
    %v391 = vld [vmem:[#allocation4 + $0x40] sm:$0xff]
    %v392 = vld [vmem:[#allocation4 + $0x48] sm:$0xff]
    %v393 = vld [vmem:[#allocation4 + $0x50] sm:$0xff]
    %v394 = vld [vmem:[#allocation4 + $0x58] sm:$0xff]
    %v395 = vld [vmem:[#allocation4 + $0x60] sm:$0xff]
    %v396 = vld [vmem:[#allocation4 + $0x68] sm:$0xff]
    %v397 = vld [vmem:[#allocation4 + $0x70] sm:$0xff]
    %v398 = vld [vmem:[#allocation4 + $0x78] sm:$0xff]
    %v399 = vld [vmem:[#allocation4 + $0x80] sm:$0xff]
    %v400 = vld [vmem:[#allocation4 + $0x88] sm:$0xff]
    %v401 = vld [vmem:[#allocation4 + $0x90] sm:$0xff]
    %v402 = vld [vmem:[#allocation4 + $0x98] sm:$0xff]
    %v403 = vld [vmem:[#allocation4 + $0xa0] sm:$0xff]
    %v404 = vld [vmem:[#allocation4 + $0xa8] sm:$0xff]
    %v405 = vld [vmem:[#allocation4 + $0xb0] sm:$0xff]
    %v406 = vld [vmem:[#allocation4 + $0xb8] sm:$0xff]
    %v407 = vld [vmem:[#allocation4 + $0xc0] sm:$0xff]
    %v408 = vld [vmem:[#allocation4 + $0xc8] sm:$0xff]
    %v409 = vld [vmem:[#allocation4 + $0xd0] sm:$0xff]
    %v410 = vld [vmem:[#allocation4 + $0xd8] sm:$0xff]
    %v411 = vld [vmem:[#allocation4 + $0xe0] sm:$0xff]
    %v412 = vld [vmem:[#allocation4 + $0xe8] sm:$0xff]
    %v413 = vld [vmem:[#allocation4 + $0xf0] sm:$0xff]
    %v414 = vld [vmem:[#allocation4 + $0xf8] sm:$0xff]
    %v415 = vld [vmem:[%s6] sm:$0xff]
    %v416 = vld [vmem:[%s6 + $0x8] sm:$0xff]
    %v417 = vld [vmem:[%s6 + $0x10] sm:$0xff]
    %v418 = vld [vmem:[%s6 + $0x18] sm:$0xff]
    %v419 = vld [vmem:[%s6 + $0x20] sm:$0xff]
    %v420 = vld [vmem:[%s6 + $0x28] sm:$0xff]
    %v421 = vld [vmem:[%s6 + $0x30] sm:$0xff]
    %v422 = vld [vmem:[%s6 + $0x38] sm:$0xff]
    %v423 = vld [vmem:[%s7] sm:$0x1]
    %vm424 = vcmask 64512
    %v426 = vsel %vm424, %v287, 0
    %v429 = vsel %vm424, %v290, 0
    %v432 = vsel %vm424, %v293, 0
    %v435 = vsel %vm424, %v296, 0
    %v438 = vsel %vm424, %v299, 0
    %v441 = vsel %vm424, %v302, 0
    %v444 = vsel %vm424, %v305, 0
    %v447 = vsel %vm424, %v308, 0
    %v450 = vsel %vm424, %v311, 0
    %v453 = vsel %vm424, %v314, 0
    %v456 = vsel %vm424, %v317, 0
    %v459 = vsel %vm424, %v320, 0
    %v462 = vsel %vm424, %v323, 0
    %v465 = vsel %vm424, %v326, 0
    %v468 = vsel %vm424, %v329, 0
    %v471 = vsel %vm424, %v332, 0
    %v474 = vsel %vm424, %v335, 0
    %v477 = vsel %vm424, %v338, 0
    %v480 = vsel %vm424, %v341, 0
    %v483 = vsel %vm424, %v344, 0
    %v486 = vsel %vm424, %v347, 0
    %v489 = vsel %vm424, %v350, 0
    %v492 = vsel %vm424, %v353, 0
    %v495 = vsel %vm424, %v356, 0
    %v498 = vsel %vm424, %v359, 0
    %v501 = vsel %vm424, %v362, 0
    %v504 = vsel %vm424, %v365, 0
    %v507 = vsel %vm424, %v368, 0
    %v510 = vsel %vm424, %v371, 0
    %v513 = vsel %vm424, %v374, 0
    %v516 = vsel %vm424, %v377, 0
    %v519 = vsel %vm424, %v380, 0
    %521 = vmatpush.msra.mxu0 0.0
    %522 = vmatpush.msra.mxu0 0.0
    %523 = vmatpush.msra.mxu0 0.0
    %524 = vmatpush.msra.mxu0 0.0
    %525 = vmatpush.msra.mxu0 0.0
    %526 = vmatpush.msra.mxu0 0.0
    %527 = vmatpush.msra.mxu0 0.0
    %528 = vmatpush.msra.mxu0 0.0
    %529 = vmatpush.msra.mxu0 0.0
    %530 = vmatpush.msra.mxu0 0.0
    %531 = vmatpush.msra.mxu0 0.0
    %532 = vmatpush.msra.mxu0 0.0
    %533 = vmatpush.msra.mxu0 0.0
    %534 = vmatpush.msra.mxu0 0.0
    %535 = vmatpush.msra.mxu0 0.0
    %536 = vmatpush.msra.mxu0 %v382
    %537 = vmatmul.f32.gmra.mxu0 %v426
    %v538 = vpop.f32.mrf.mxu0
    %v539 = vadd.f32 0.0, %v538
    %540 = vmatmul.f32.gmra.mxu0 %v429
    %v541 = vpop.f32.mrf.mxu0
    %v542 = vadd.f32 0.0, %v541
    %543 = vmatmul.f32.gmra.mxu0 %v432
    %v544 = vpop.f32.mrf.mxu0
    %v545 = vadd.f32 0.0, %v544
    %546 = vmatmul.f32.gmra.mxu0 %v435
    %v547 = vpop.f32.mrf.mxu0
    %v548 = vadd.f32 0.0, %v547
    %549 = vmatmul.f32.gmra.mxu0 %v438
    %v550 = vpop.f32.mrf.mxu0
    %v551 = vadd.f32 0.0, %v550
    %552 = vmatmul.f32.gmra.mxu0 %v441
    %v553 = vpop.f32.mrf.mxu0
    %v554 = vadd.f32 0.0, %v553
    %555 = vmatmul.f32.gmra.mxu0 %v444
    %v556 = vpop.f32.mrf.mxu0
    %v557 = vadd.f32 0.0, %v556
    %558 = vmatmul.f32.gmra.mxu0 %v447
    %v559 = vpop.f32.mrf.mxu0
    %v560 = vadd.f32 0.0, %v559
    %561 = vmatmul.f32.gmra.mxu0 %v450
    %v562 = vpop.f32.mrf.mxu0
    %v563 = vadd.f32 0.0, %v562
    %564 = vmatmul.f32.gmra.mxu0 %v453
    %v565 = vpop.f32.mrf.mxu0
    %v566 = vadd.f32 0.0, %v565
    %567 = vmatmul.f32.gmra.mxu0 %v456
    %v568 = vpop.f32.mrf.mxu0
    %v569 = vadd.f32 0.0, %v568
    %570 = vmatmul.f32.gmra.mxu0 %v459
    %v571 = vpop.f32.mrf.mxu0
    %v572 = vadd.f32 0.0, %v571
    %573 = vmatmul.f32.gmra.mxu0 %v462
    %v574 = vpop.f32.mrf.mxu0
    %v575 = vadd.f32 0.0, %v574
    %576 = vmatmul.f32.gmra.mxu0 %v465
    %v577 = vpop.f32.mrf.mxu0
    %v578 = vadd.f32 0.0, %v577
    %579 = vmatmul.f32.gmra.mxu0 %v468
    %v580 = vpop.f32.mrf.mxu0
    %v581 = vadd.f32 0.0, %v580
    %582 = vmatmul.f32.gmra.mxu0 %v471
    %v583 = vpop.f32.mrf.mxu0
    %v584 = vadd.f32 0.0, %v583
    %585 = vmatmul.f32.gmra.mxu0 %v474
    %v586 = vpop.f32.mrf.mxu0
    %v587 = vadd.f32 0.0, %v586
    %588 = vmatmul.f32.gmra.mxu0 %v477
    %v589 = vpop.f32.mrf.mxu0
    %v590 = vadd.f32 0.0, %v589
    %591 = vmatmul.f32.gmra.mxu0 %v480
    %v592 = vpop.f32.mrf.mxu0
    %v593 = vadd.f32 0.0, %v592
    %594 = vmatmul.f32.gmra.mxu0 %v483
    %v595 = vpop.f32.mrf.mxu0
    %v596 = vadd.f32 0.0, %v595
    %597 = vmatmul.f32.gmra.mxu0 %v486
    %v598 = vpop.f32.mrf.mxu0
    %v599 = vadd.f32 0.0, %v598
    %600 = vmatmul.f32.gmra.mxu0 %v489
    %v601 = vpop.f32.mrf.mxu0
    %v602 = vadd.f32 0.0, %v601
    %603 = vmatmul.f32.gmra.mxu0 %v492
    %v604 = vpop.f32.mrf.mxu0
    %v605 = vadd.f32 0.0, %v604
    %606 = vmatmul.f32.gmra.mxu0 %v495
    %v607 = vpop.f32.mrf.mxu0
    %v608 = vadd.f32 0.0, %v607
    %609 = vmatmul.f32.gmra.mxu0 %v498
    %v610 = vpop.f32.mrf.mxu0
    %v611 = vadd.f32 0.0, %v610
    %612 = vmatmul.f32.gmra.mxu0 %v501
    %v613 = vpop.f32.mrf.mxu0
    %v614 = vadd.f32 0.0, %v613
    %615 = vmatmul.f32.gmra.mxu0 %v504
    %v616 = vpop.f32.mrf.mxu0
    %v617 = vadd.f32 0.0, %v616
    %618 = vmatmul.f32.gmra.mxu0 %v507
    %v619 = vpop.f32.mrf.mxu0
    %v620 = vadd.f32 0.0, %v619
    %621 = vmatmul.f32.gmra.mxu0 %v510
    %v622 = vpop.f32.mrf.mxu0
    %v623 = vadd.f32 0.0, %v622
    %624 = vmatmul.f32.gmra.mxu0 %v513
    %v625 = vpop.f32.mrf.mxu0
    %v626 = vadd.f32 0.0, %v625
    %627 = vmatmul.f32.gmra.mxu0 %v516
    %v628 = vpop.f32.mrf.mxu0
    %v629 = vadd.f32 0.0, %v628
    %630 = vmatmul.f32.gmra.mxu0 %v519
    %v631 = vpop.f32.mrf.mxu0
    %v632 = vadd.f32 0.0, %v631
    %633 = vdwg.mxu0
    %v634 = vmul.f32 %v539, %v383
    %v635 = vmul.f32 %v542, %v384
    %v636 = vmul.f32 %v545, %v385
    %v637 = vmul.f32 %v548, %v386
    %v638 = vmul.f32 %v551, %v387
    %v639 = vmul.f32 %v554, %v388
    %v640 = vmul.f32 %v557, %v389
    %v641 = vmul.f32 %v560, %v390
    %v642 = vmul.f32 %v563, %v391
    %v643 = vmul.f32 %v566, %v392
    %v644 = vmul.f32 %v569, %v393
    %v645 = vmul.f32 %v572, %v394
    %v646 = vmul.f32 %v575, %v395
    %v647 = vmul.f32 %v578, %v396
    %v648 = vmul.f32 %v581, %v397
    %v649 = vmul.f32 %v584, %v398
    %v650 = vmul.f32 %v587, %v399
    %v651 = vmul.f32 %v590, %v400
    %v652 = vmul.f32 %v593, %v401
    %v653 = vmul.f32 %v596, %v402
    %v654 = vmul.f32 %v599, %v403
    %v655 = vmul.f32 %v602, %v404
    %v656 = vmul.f32 %v605, %v405
    %v657 = vmul.f32 %v608, %v406
    %v658 = vmul.f32 %v611, %v407
    %v659 = vmul.f32 %v614, %v408
    %v660 = vmul.f32 %v617, %v409
    %v661 = vmul.f32 %v620, %v410
    %v662 = vmul.f32 %v623, %v411
    %v663 = vmul.f32 %v626, %v412
    %v664 = vmul.f32 %v629, %v413
    %v665 = vmul.f32 %v632, %v414
    %666 = vmatpush.msra.mxu0 %v649
    %667 = vmatpush.msra.mxu0 %v648
    %668 = vmatpush.msra.mxu0 %v647
    %669 = vmatpush.msra.mxu0 %v646
    %670 = vmatpush.msra.mxu0 %v645
    %671 = vmatpush.msra.mxu0 %v644
    %672 = vmatpush.msra.mxu0 %v643
    %673 = vmatpush.msra.mxu0 %v642
    %674 = vmatpush.msra.mxu0 %v641
    %675 = vmatpush.msra.mxu0 %v640
    %676 = vmatpush.msra.mxu0 %v639
    %677 = vmatpush.msra.mxu0 %v638
    %678 = vmatpush.msra.mxu0 %v637
    %679 = vmatpush.msra.mxu0 %v636
    %680 = vmatpush.msra.mxu0 %v635
    %681 = vmatpush.msra.mxu0 %v634
    %682 = vmatmul.f32.gmra.mxu0 %v105
    %v683 = vpop.f32.mrf.mxu0
    %v684 = vadd.f32 0.0, %v683
    %685 = vdwg.mxu0
    %686 = vmatpush.msra.mxu0 %v665
    %687 = vmatpush.msra.mxu0 %v664
    %688 = vmatpush.msra.mxu0 %v663
    %689 = vmatpush.msra.mxu0 %v662
    %690 = vmatpush.msra.mxu0 %v661
    %691 = vmatpush.msra.mxu0 %v660
    %692 = vmatpush.msra.mxu0 %v659
    %693 = vmatpush.msra.mxu0 %v658
    %694 = vmatpush.msra.mxu0 %v657
    %695 = vmatpush.msra.mxu0 %v656
    %696 = vmatpush.msra.mxu0 %v655
    %697 = vmatpush.msra.mxu0 %v654
    %698 = vmatpush.msra.mxu0 %v653
    %699 = vmatpush.msra.mxu0 %v652
    %700 = vmatpush.msra.mxu0 %v651
    %701 = vmatpush.msra.mxu0 %v650
    %702 = vmatmul.f32.gmra.mxu0 %v128
    %v703 = vpop.f32.mrf.mxu0
    %v704 = vadd.f32 %v684, %v703
    %705 = vdwg.mxu0
    %v706 = vxor.u32 %v704, 2147483648
    %v707 = vmul.f32 %v706, 1.442695
    %v708 = vpow.pop %v707
    %v709 = vadd.f32 %v708, 1.0
    %v710 = vrcp.pop %v709
    %v711 = vmul.f32 %v709, %v710
    %v712 = vsub.f32 1.0, %v711
    %v713 = vmul.f32 %v710, %v712
    %v714 = vadd.f32 %v710, %v713
    %vm715 = vweird.f32 %v709
    %vm716 = vweird.f32 %v710
    %vm717 = vmor %vm715, %vm716
    %v718 = vsel %vm717, %v710, %v714
    %v719 = vand.u32 2147483647, %v709
    %vm720 = vcmp.eq.f32.partialorder %v719, 8.507059e+37
    %v721 = vand.u32 %v709, 2147483648
    %v722 = vor.u32 1.1754944e-38, %v721
    %v723 = vsel %vm720, %v722, %v718
    %v724 = vmul.f32 1.0, %v723
    %v726 = vperm.slane %v423, 0
    %vm728 = vcmask 523264
    %v730 = vsel %vm728, %v724, 0
    %732 = vmatpush.msra.mxu0 0.0
    %733 = vmatpush.msra.mxu0 0.0
    %734 = vmatpush.msra.mxu0 0.0
    %735 = vmatpush.msra.mxu0 0.0
    %736 = vmatpush.msra.mxu0 0.0
    %737 = vmatpush.msra.mxu0 0.0
    %738 = vmatpush.msra.mxu0 0.0
    %739 = vmatpush.msra.mxu0 0.0
    %740 = vmatpush.msra.mxu0 %v422
    %741 = vmatpush.msra.mxu0 %v421
    %742 = vmatpush.msra.mxu0 %v420
    %743 = vmatpush.msra.mxu0 %v419
    %744 = vmatpush.msra.mxu0 %v418
    %745 = vmatpush.msra.mxu0 %v417
    %746 = vmatpush.msra.mxu0 %v416
    %747 = vmatpush.msra.mxu0 %v415
    %748 = vmatmul.f32.gmra.mxu0 %v730
    %v749 = vpop.f32.mrf.mxu0
    %v750 = vadd.f32 %v726, %v749
    %751 = vdwg.mxu0
    %v752 = vmax.f32 %v750, 0.0
    %v753 = vmin.f32 %v752, 1.0
    %v754 = vmul.f32 %v753, 0.9
    %v755 = vadd.f32 %v754, 0.05
    %757 = vrot.lane.b32.xlu0 %v755, 64
    %v758 = vpop.permute.xlu0 %757
    %v760 = vsel %vm728, %v724, %v758
    %vm761 = vcmask 785408
    %v762 = vsel %vm761, %v760, 0.0
    %763 = vst [vmem:[%s8] sm:$0xff] %v762
    %764 = vrot.lane.b32.xlu0 %v287, 120
    %v765 = vpop.permute.xlu0 %764
    %766 = vrot.lane.b32.xlu0 %v290, 120
    %v767 = vpop.permute.xlu0 %766
    %768 = vrot.lane.b32.xlu0 %v293, 120
    %v769 = vpop.permute.xlu0 %768
    %770 = vrot.lane.b32.xlu0 %v296, 120
    %v771 = vpop.permute.xlu0 %770
    %772 = vrot.lane.b32.xlu0 %v299, 120
    %v773 = vpop.permute.xlu0 %772
    %774 = vrot.lane.b32.xlu0 %v302, 120
    %v775 = vpop.permute.xlu0 %774
    %776 = vrot.lane.b32.xlu0 %v305, 120
    %v777 = vpop.permute.xlu0 %776
    %778 = vrot.lane.b32.xlu0 %v308, 120
    %v779 = vpop.permute.xlu0 %778
    %780 = vrot.lane.b32.xlu0 %v311, 120
    %v781 = vpop.permute.xlu0 %780
    %782 = vrot.lane.b32.xlu0 %v314, 120
    %v783 = vpop.permute.xlu0 %782
    %784 = vrot.lane.b32.xlu0 %v317, 120
    %v785 = vpop.permute.xlu0 %784
    %786 = vrot.lane.b32.xlu0 %v320, 120
    %v787 = vpop.permute.xlu0 %786
    %788 = vrot.lane.b32.xlu0 %v323, 120
    %v789 = vpop.permute.xlu0 %788
    %790 = vrot.lane.b32.xlu0 %v326, 120
    %v791 = vpop.permute.xlu0 %790
    %792 = vrot.lane.b32.xlu0 %v329, 120
    %v793 = vpop.permute.xlu0 %792
    %794 = vrot.lane.b32.xlu0 %v332, 120
    %v795 = vpop.permute.xlu0 %794
    %796 = vrot.lane.b32.xlu0 %v335, 120
    %v797 = vpop.permute.xlu0 %796
    %798 = vrot.lane.b32.xlu0 %v338, 120
    %v799 = vpop.permute.xlu0 %798
    %800 = vrot.lane.b32.xlu0 %v341, 120
    %v801 = vpop.permute.xlu0 %800
    %802 = vrot.lane.b32.xlu0 %v344, 120
    %v803 = vpop.permute.xlu0 %802
    %804 = vrot.lane.b32.xlu0 %v347, 120
    %v805 = vpop.permute.xlu0 %804
    %806 = vrot.lane.b32.xlu0 %v350, 120
    %v807 = vpop.permute.xlu0 %806
    %808 = vrot.lane.b32.xlu0 %v353, 120
    %v809 = vpop.permute.xlu0 %808
    %810 = vrot.lane.b32.xlu0 %v356, 120
    %v811 = vpop.permute.xlu0 %810
    %812 = vrot.lane.b32.xlu0 %v359, 120
    %v813 = vpop.permute.xlu0 %812
    %814 = vrot.lane.b32.xlu0 %v362, 120
    %v815 = vpop.permute.xlu0 %814
    %816 = vrot.lane.b32.xlu0 %v365, 120
    %v817 = vpop.permute.xlu0 %816
    %818 = vrot.lane.b32.xlu0 %v368, 120
    %v819 = vpop.permute.xlu0 %818
    %820 = vrot.lane.b32.xlu0 %v371, 120
    %v821 = vpop.permute.xlu0 %820
    %822 = vrot.lane.b32.xlu0 %v374, 120
    %v823 = vpop.permute.xlu0 %822
    %824 = vrot.lane.b32.xlu0 %v377, 120
    %v825 = vpop.permute.xlu0 %824
    %826 = vrot.lane.b32.xlu0 %v380, 120
    %v827 = vpop.permute.xlu0 %826
    %v828 = vsel %vm424, %v765, 0
    %v830 = vsel %vm424, %v767, 0
    %v832 = vsel %vm424, %v769, 0
    %v834 = vsel %vm424, %v771, 0
    %v836 = vsel %vm424, %v773, 0
    %v838 = vsel %vm424, %v775, 0
    %v840 = vsel %vm424, %v777, 0
    %v842 = vsel %vm424, %v779, 0
    %v844 = vsel %vm424, %v781, 0
    %v846 = vsel %vm424, %v783, 0
    %v848 = vsel %vm424, %v785, 0
    %v850 = vsel %vm424, %v787, 0
    %v852 = vsel %vm424, %v789, 0
    %v854 = vsel %vm424, %v791, 0
    %v856 = vsel %vm424, %v793, 0
    %v858 = vsel %vm424, %v795, 0
    %v860 = vsel %vm424, %v797, 0
    %v862 = vsel %vm424, %v799, 0
    %v864 = vsel %vm424, %v801, 0
    %v866 = vsel %vm424, %v803, 0
    %v868 = vsel %vm424, %v805, 0
    %v870 = vsel %vm424, %v807, 0
    %v872 = vsel %vm424, %v809, 0
    %v874 = vsel %vm424, %v811, 0
    %v876 = vsel %vm424, %v813, 0
    %v878 = vsel %vm424, %v815, 0
    %v880 = vsel %vm424, %v817, 0
    %v882 = vsel %vm424, %v819, 0
    %v884 = vsel %vm424, %v821, 0
    %v886 = vsel %vm424, %v823, 0
    %v888 = vsel %vm424, %v825, 0
    %v890 = vsel %vm424, %v827, 0
    %892 = vmatpush.msra.mxu0 0.0
    %893 = vmatpush.msra.mxu0 0.0
    %894 = vmatpush.msra.mxu0 0.0
    %895 = vmatpush.msra.mxu0 0.0
    %896 = vmatpush.msra.mxu0 0.0
    %897 = vmatpush.msra.mxu0 0.0
    %898 = vmatpush.msra.mxu0 0.0
    %899 = vmatpush.msra.mxu0 0.0
    %900 = vmatpush.msra.mxu0 0.0
    %901 = vmatpush.msra.mxu0 0.0
    %902 = vmatpush.msra.mxu0 0.0
    %903 = vmatpush.msra.mxu0 0.0
    %904 = vmatpush.msra.mxu0 0.0
    %905 = vmatpush.msra.mxu0 0.0
    %906 = vmatpush.msra.mxu0 0.0
    %907 = vmatpush.msra.mxu0 %v382
    %908 = vmatmul.f32.gmra.mxu0 %v828
    %v909 = vpop.f32.mrf.mxu0
    %v910 = vadd.f32 0.0, %v909
    %911 = vmatmul.f32.gmra.mxu0 %v830
    %v912 = vpop.f32.mrf.mxu0
    %v913 = vadd.f32 0.0, %v912
    %914 = vmatmul.f32.gmra.mxu0 %v832
    %v915 = vpop.f32.mrf.mxu0
    %v916 = vadd.f32 0.0, %v915
    %917 = vmatmul.f32.gmra.mxu0 %v834
    %v918 = vpop.f32.mrf.mxu0
    %v919 = vadd.f32 0.0, %v918
    %920 = vmatmul.f32.gmra.mxu0 %v836
    %v921 = vpop.f32.mrf.mxu0
    %v922 = vadd.f32 0.0, %v921
    %923 = vmatmul.f32.gmra.mxu0 %v838
    %v924 = vpop.f32.mrf.mxu0
    %v925 = vadd.f32 0.0, %v924
    %926 = vmatmul.f32.gmra.mxu0 %v840
    %v927 = vpop.f32.mrf.mxu0
    %v928 = vadd.f32 0.0, %v927
    %929 = vmatmul.f32.gmra.mxu0 %v842
    %v930 = vpop.f32.mrf.mxu0
    %v931 = vadd.f32 0.0, %v930
    %932 = vmatmul.f32.gmra.mxu0 %v844
    %v933 = vpop.f32.mrf.mxu0
    %v934 = vadd.f32 0.0, %v933
    %935 = vmatmul.f32.gmra.mxu0 %v846
    %v936 = vpop.f32.mrf.mxu0
    %v937 = vadd.f32 0.0, %v936
    %938 = vmatmul.f32.gmra.mxu0 %v848
    %v939 = vpop.f32.mrf.mxu0
    %v940 = vadd.f32 0.0, %v939
    %941 = vmatmul.f32.gmra.mxu0 %v850
    %v942 = vpop.f32.mrf.mxu0
    %v943 = vadd.f32 0.0, %v942
    %944 = vmatmul.f32.gmra.mxu0 %v852
    %v945 = vpop.f32.mrf.mxu0
    %v946 = vadd.f32 0.0, %v945
    %947 = vmatmul.f32.gmra.mxu0 %v854
    %v948 = vpop.f32.mrf.mxu0
    %v949 = vadd.f32 0.0, %v948
    %950 = vmatmul.f32.gmra.mxu0 %v856
    %v951 = vpop.f32.mrf.mxu0
    %v952 = vadd.f32 0.0, %v951
    %953 = vmatmul.f32.gmra.mxu0 %v858
    %v954 = vpop.f32.mrf.mxu0
    %v955 = vadd.f32 0.0, %v954
    %956 = vmatmul.f32.gmra.mxu0 %v860
    %v957 = vpop.f32.mrf.mxu0
    %v958 = vadd.f32 0.0, %v957
    %959 = vmatmul.f32.gmra.mxu0 %v862
    %v960 = vpop.f32.mrf.mxu0
    %v961 = vadd.f32 0.0, %v960
    %962 = vmatmul.f32.gmra.mxu0 %v864
    %v963 = vpop.f32.mrf.mxu0
    %v964 = vadd.f32 0.0, %v963
    %965 = vmatmul.f32.gmra.mxu0 %v866
    %v966 = vpop.f32.mrf.mxu0
    %v967 = vadd.f32 0.0, %v966
    %968 = vmatmul.f32.gmra.mxu0 %v868
    %v969 = vpop.f32.mrf.mxu0
    %v970 = vadd.f32 0.0, %v969
    %971 = vmatmul.f32.gmra.mxu0 %v870
    %v972 = vpop.f32.mrf.mxu0
    %v973 = vadd.f32 0.0, %v972
    %974 = vmatmul.f32.gmra.mxu0 %v872
    %v975 = vpop.f32.mrf.mxu0
    %v976 = vadd.f32 0.0, %v975
    %977 = vmatmul.f32.gmra.mxu0 %v874
    %v978 = vpop.f32.mrf.mxu0
    %v979 = vadd.f32 0.0, %v978
    %980 = vmatmul.f32.gmra.mxu0 %v876
    %v981 = vpop.f32.mrf.mxu0
    %v982 = vadd.f32 0.0, %v981
    %983 = vmatmul.f32.gmra.mxu0 %v878
    %v984 = vpop.f32.mrf.mxu0
    %v985 = vadd.f32 0.0, %v984
    %986 = vmatmul.f32.gmra.mxu0 %v880
    %v987 = vpop.f32.mrf.mxu0
    %v988 = vadd.f32 0.0, %v987
    %989 = vmatmul.f32.gmra.mxu0 %v882
    %v990 = vpop.f32.mrf.mxu0
    %v991 = vadd.f32 0.0, %v990
    %992 = vmatmul.f32.gmra.mxu0 %v884
    %v993 = vpop.f32.mrf.mxu0
    %v994 = vadd.f32 0.0, %v993
    %995 = vmatmul.f32.gmra.mxu0 %v886
    %v996 = vpop.f32.mrf.mxu0
    %v997 = vadd.f32 0.0, %v996
    %998 = vmatmul.f32.gmra.mxu0 %v888
    %v999 = vpop.f32.mrf.mxu0
    %v1000 = vadd.f32 0.0, %v999
    %1001 = vmatmul.f32.gmra.mxu0 %v890
    %v1002 = vpop.f32.mrf.mxu0
    %v1003 = vadd.f32 0.0, %v1002
    %1004 = vdwg.mxu0
    %v1005 = vmul.f32 %v910, %v383
    %v1006 = vmul.f32 %v913, %v384
    %v1007 = vmul.f32 %v916, %v385
    %v1008 = vmul.f32 %v919, %v386
    %v1009 = vmul.f32 %v922, %v387
    %v1010 = vmul.f32 %v925, %v388
    %v1011 = vmul.f32 %v928, %v389
    %v1012 = vmul.f32 %v931, %v390
    %v1013 = vmul.f32 %v934, %v391
    %v1014 = vmul.f32 %v937, %v392
    %v1015 = vmul.f32 %v940, %v393
    %v1016 = vmul.f32 %v943, %v394
    %v1017 = vmul.f32 %v946, %v395
    %v1018 = vmul.f32 %v949, %v396
    %v1019 = vmul.f32 %v952, %v397
    %v1020 = vmul.f32 %v955, %v398
    %v1021 = vmul.f32 %v958, %v399
    %v1022 = vmul.f32 %v961, %v400
    %v1023 = vmul.f32 %v964, %v401
    %v1024 = vmul.f32 %v967, %v402
    %v1025 = vmul.f32 %v970, %v403
    %v1026 = vmul.f32 %v973, %v404
    %v1027 = vmul.f32 %v976, %v405
    %v1028 = vmul.f32 %v979, %v406
    %v1029 = vmul.f32 %v982, %v407
    %v1030 = vmul.f32 %v985, %v408
    %v1031 = vmul.f32 %v988, %v409
    %v1032 = vmul.f32 %v991, %v410
    %v1033 = vmul.f32 %v994, %v411
    %v1034 = vmul.f32 %v997, %v412
    %v1035 = vmul.f32 %v1000, %v413
    %v1036 = vmul.f32 %v1003, %v414
    %1037 = vmatpush.msra.mxu0 %v1020
    %1038 = vmatpush.msra.mxu0 %v1019
    %1039 = vmatpush.msra.mxu0 %v1018
    %1040 = vmatpush.msra.mxu0 %v1017
    %1041 = vmatpush.msra.mxu0 %v1016
    %1042 = vmatpush.msra.mxu0 %v1015
    %1043 = vmatpush.msra.mxu0 %v1014
    %1044 = vmatpush.msra.mxu0 %v1013
    %1045 = vmatpush.msra.mxu0 %v1012
    %1046 = vmatpush.msra.mxu0 %v1011
    %1047 = vmatpush.msra.mxu0 %v1010
    %1048 = vmatpush.msra.mxu0 %v1009
    %1049 = vmatpush.msra.mxu0 %v1008
    %1050 = vmatpush.msra.mxu0 %v1007
    %1051 = vmatpush.msra.mxu0 %v1006
    %1052 = vmatpush.msra.mxu0 %v1005
    %1053 = vmatmul.f32.gmra.mxu0 %v108
    %v1054 = vpop.f32.mrf.mxu0
    %v1055 = vadd.f32 0.0, %v1054
    %1056 = vdwg.mxu0
    %1057 = vmatpush.msra.mxu0 %v1036
    %1058 = vmatpush.msra.mxu0 %v1035
    %1059 = vmatpush.msra.mxu0 %v1034
    %1060 = vmatpush.msra.mxu0 %v1033
    %1061 = vmatpush.msra.mxu0 %v1032
    %1062 = vmatpush.msra.mxu0 %v1031
    %1063 = vmatpush.msra.mxu0 %v1030
    %1064 = vmatpush.msra.mxu0 %v1029
    %1065 = vmatpush.msra.mxu0 %v1028
    %1066 = vmatpush.msra.mxu0 %v1027
    %1067 = vmatpush.msra.mxu0 %v1026
    %1068 = vmatpush.msra.mxu0 %v1025
    %1069 = vmatpush.msra.mxu0 %v1024
    %1070 = vmatpush.msra.mxu0 %v1023
    %1071 = vmatpush.msra.mxu0 %v1022
    %1072 = vmatpush.msra.mxu0 %v1021
    %1073 = vmatmul.f32.gmra.mxu0 %v131
    %v1074 = vpop.f32.mrf.mxu0
    %v1075 = vadd.f32 %v1055, %v1074
    %1076 = vdwg.mxu0
    %v1077 = vxor.u32 %v1075, 2147483648
    %v1078 = vmul.f32 %v1077, 1.442695
    %v1079 = vpow.pop %v1078
    %v1080 = vadd.f32 %v1079, 1.0
    %v1081 = vrcp.pop %v1080
    %v1082 = vmul.f32 %v1080, %v1081
    %v1083 = vsub.f32 1.0, %v1082
    %v1084 = vmul.f32 %v1081, %v1083
    %v1085 = vadd.f32 %v1081, %v1084
    %vm1086 = vweird.f32 %v1080
    %vm1087 = vweird.f32 %v1081
    %vm1088 = vmor %vm1086, %vm1087
    %v1089 = vsel %vm1088, %v1081, %v1085
    %v1090 = vand.u32 2147483647, %v1080
    %vm1091 = vcmp.eq.f32.partialorder %v1090, 8.507059e+37
    %v1092 = vand.u32 %v1080, 2147483648
    %v1093 = vor.u32 1.1754944e-38, %v1092
    %v1094 = vsel %vm1091, %v1093, %v1089
    %v1095 = vmul.f32 1.0, %v1094
    %v1097 = vsel %vm728, %v1095, 0
    %1099 = vmatpush.msra.mxu0 0.0
    %1100 = vmatpush.msra.mxu0 0.0
    %1101 = vmatpush.msra.mxu0 0.0
    %1102 = vmatpush.msra.mxu0 0.0
    %1103 = vmatpush.msra.mxu0 0.0
    %1104 = vmatpush.msra.mxu0 0.0
    %1105 = vmatpush.msra.mxu0 0.0
    %1106 = vmatpush.msra.mxu0 0.0
    %1107 = vmatpush.msra.mxu0 %v422
    %1108 = vmatpush.msra.mxu0 %v421
    %1109 = vmatpush.msra.mxu0 %v420
    %1110 = vmatpush.msra.mxu0 %v419
    %1111 = vmatpush.msra.mxu0 %v418
    %1112 = vmatpush.msra.mxu0 %v417
    %1113 = vmatpush.msra.mxu0 %v416
    %1114 = vmatpush.msra.mxu0 %v415
    %1115 = vmatmul.f32.gmra.mxu0 %v1097
    %v1116 = vpop.f32.mrf.mxu0
    %v1117 = vadd.f32 %v726, %v1116
    %1118 = vdwg.mxu0
    %v1119 = vmax.f32 %v1117, 0.0
    %v1120 = vmin.f32 %v1119, 1.0
    %v1121 = vmul.f32 %v1120, 0.9
    %v1122 = vadd.f32 %v1121, 0.05
    %1124 = vrot.lane.b32.xlu0 %v1122, 64
    %v1125 = vpop.permute.xlu0 %1124
    %v1127 = vsel %vm728, %v1095, %v1125
    %v1128 = vsel %vm761, %v1127, 0.0
    %1129 = vst [vmem:[%s8 + $0x8] sm:$0xff] %v1128
    // Predicated region
    $region42: #{_forward.1} parent=1 // pred_check
      _
    $region43: #{_forward.1} parent=1 // pred_check_branch
      %1131 = sbr.rel (0) target = $region45
    $region44: #{_forward.1} parent=1 // pred_region
      _
    $region45: #{_forward.1} parent=1 // pred_fallthru
      _
    // Predicated region
    $region46: #{_forward.1} parent=1 // pred_check
      _
    $region47: #{_forward.1} parent=1 // pred_check_branch
      %1133 = sbr.rel (0) target = $region49
    $region48: #{_forward.1} parent=1 // pred_region
      _
    $region49: #{_forward.1} parent=1 // pred_fallthru
      _
    %1134 = vsyncpa [#allocation3], 1
    %1135 = vsyncpa [#allocation5], 1

</llo_original>
